<compile_context>
chip_gen: v7x
topology: tpu7x:2x2x1
jax: 0.10.0
libtpu: 0.0.40
codegen_flags: <defaults>
</compile_context>

<pallas_src>
import dataclasses
import functools
import math

import jax
import jax.numpy as jnp
from jax.experimental import pallas as pl
from jax.experimental.pallas import tpu as pltpu


def _round_up(n, m):
    return ((n + m - 1) // m) * m


def _vmem_capacity_bytes():
    try:
        return int(pltpu.get_tpu_info().vmem_capacity_bytes)
    except Exception:
        return 64 << 20  # conservative fallback = v7x per-TC VMEM


_VMEM_CAP = _vmem_capacity_bytes()


# ----------------------------------------------------------------------------
# Kernels
# ----------------------------------------------------------------------------
def ffn_kernel_resident(x_ref, w1_ref, b1_ref, w2_ref, b2_ref, o_ref):
    """Weights fully VMEM-resident; grid = (row tiles,) only."""
    h = jnp.dot(x_ref[...], w1_ref[...], preferred_element_type=jnp.float32)
    h = jnp.maximum(h + b1_ref[...], 0.0)                       # bias + ReLU (f32)
    y = jnp.dot(h.astype(w2_ref.dtype), w2_ref[...],
                preferred_element_type=jnp.float32)
    o_ref[...] = (y + b2_ref[...]).astype(o_ref.dtype)


def ffn_kernel_streamed(x_ref, w1_ref, b1_ref, w2_ref, b2_ref, o_ref, acc_ref):
    """d_ff-tiled reduction; grid = (row tiles, d_ff tiles), reduction last."""
    k = pl.program_id(1)

    @pl.when(k == 0)
    def _init():
        # Fold the output bias into the accumulator init (one less VPU pass).
        acc_ref[...] = jnp.broadcast_to(b2_ref[...], acc_ref.shape)

    h = jnp.dot(x_ref[...], w1_ref[...], preferred_element_type=jnp.float32)
    h = jnp.maximum(h + b1_ref[...], 0.0)
    # Keep the fused accumulate form (v7x MRB can absorb it into the MXU path).
    acc_ref[...] += jnp.dot(h.astype(w2_ref.dtype), w2_ref[...],
                            preferred_element_type=jnp.float32)

    @pl.when(k == pl.num_programs(1) - 1)
    def _finalize():
        o_ref[...] = acc_ref[...].astype(o_ref.dtype)


# ----------------------------------------------------------------------------
# Parameter preparation (done ONCE, outside the per-call path)
# ----------------------------------------------------------------------------
@dataclasses.dataclass(frozen=True)
class FFNParams:
    w1: jax.Array   # (d_model_p, d_ff_p), storage dtype (bf16 recommended)
    b1: jax.Array   # (1, d_ff_p), f32
    w2: jax.Array   # (d_ff_p, d_model_p), storage dtype
    b2: jax.Array   # (1, d_model_p), f32
    d_model: int
    d_ff: int
    tk: int         # d_ff reduction tile for the streaming path (multiple of 256)


def prepare_params(w1, b1, w2, b2, *, tk_ff=512):
    """Pad weights/biases once to lane/sublane-friendly extents.

    w1: (d_model, d_ff) = fc1.weight.T, w2: (d_ff, d_model) = fc2.weight.T.
    bf16 weights are recommended on v5e, v6e and v7x (bf16-native MXUs, half
    the HBM traffic); biases are kept in f32 (VPU math is f32). Zero padding
    is mathematically neutral for this FFN.
    """
    d_model, d_ff = w1.shape
    d_model_p = _round_up(d_model, 128)                 # lane-dense output dim
    tk = _round_up(min(tk_ff, _round_up(d_ff, 256)), 256)
    d_ff_p = _round_up(d_ff, tk)
    w1_p = jnp.pad(w1, ((0, d_model_p - d_model), (0, d_ff_p - d_ff)))
    b1_p = jnp.pad(b1.reshape(1, d_ff).astype(jnp.float32),
                   ((0, 0), (0, d_ff_p - d_ff)))
    w2_p = jnp.pad(w2, ((0, d_ff_p - d_ff), (0, d_model_p - d_model)))
    b2_p = jnp.pad(b2.reshape(1, d_model).astype(jnp.float32),
                   ((0, 0), (0, d_model_p - d_model)))
    return FFNParams(w1_p, b1_p, w2_p, b2_p, d_model, d_ff, tk)


# ----------------------------------------------------------------------------
# Forward pass
# ----------------------------------------------------------------------------
@functools.partial(jax.jit, static_argnames=("tk", "tm", "force_streaming"))
def _ffn_impl(x, w1_p, b1_p, w2_p, b2_p, *, tk, tm, force_streaming):
    batch, seq, d_model = x.shape
    d_model_p, d_ff_p = w1_p.shape
    M = batch * seq
    out_dtype = x.dtype
    w_dtype = w1_p.dtype
    w_bytes = jnp.dtype(w_dtype).itemsize
    out_bytes = jnp.dtype(out_dtype).itemsize

    # Row tile: as large as requested, but guarantee >= 2 tiles on the
    # "parallel" axis when there is enough work (v7x has 2 TensorCores).
    tm_eff = min(tm, _round_up(M, 8))
    if M >= 16 and _round_up(M, tm_eff) // tm_eff < 2:
        tm_eff = _round_up(-(-M // 2), 8)
    M_p = _round_up(M, tm_eff)

    # Pre-cast activations to the weight dtype (halves x DMA for bf16 weights,
    # removes the per-step VPU cast from the kernel). Pad only if needed.
    x2d = x.reshape(M, d_model).astype(w_dtype)
    if M_p != M or d_model_p != d_model:
        x2d = jnp.pad(x2d, ((0, M_p - M), (0, d_model_p - d_model)))

    # --- per-generation residency decision ---------------------------------
    budget = int(0.70 * _VMEM_CAP)   # ~45 MiB on v7x (64 MiB), ~90 MiB on v5e/v6e
    resident_bytes = (
        2 * 2 * d_model_p * d_ff_p * w_bytes            # w1 + w2 (conservative 2x)
        + 2 * tm_eff * d_model_p * (w_bytes + out_bytes)  # x / out tiles (2 bufs)
        + 2 * (d_ff_p + d_model_p) * 4                  # biases
        + tm_eff * d_ff_p * (4 + w_bytes)               # h f32 temp + downcast copy
        + tm_eff * d_model_p * 4                        # f32 y before bias/cast
    )
    use_resident = (not force_streaming) and resident_bytes <= budget

    if use_resident:
        grid = (M_p // tm_eff,)
        vmem_limit = min(resident_bytes + (8 << 20), _VMEM_CAP - (2 << 20))
        out2d = pl.pallas_call(
            ffn_kernel_resident,
            out_shape=jax.ShapeDtypeStruct((M_p, d_model_p), out_dtype),
            grid_spec=pltpu.PrefetchScalarGridSpec(
                num_scalar_prefetch=0,
                grid=grid,
                in_specs=[
                    pl.BlockSpec((tm_eff, d_model_p), lambda i: (i, 0)),   # x rows
                    pl.BlockSpec((d_model_p, d_ff_p), lambda i: (0, 0)),   # w1 resident
                    pl.BlockSpec((1, d_ff_p), lambda i: (0, 0)),           # b1 resident
                    pl.BlockSpec((d_ff_p, d_model_p), lambda i: (0, 0)),   # w2 resident
                    pl.BlockSpec((1, d_model_p), lambda i: (0, 0)),        # b2 resident
                ],
                out_specs=pl.BlockSpec((tm_eff, d_model_p), lambda i: (i, 0)),
            ),
            compiler_params=pltpu.CompilerParams(
                dimension_semantics=("parallel",),
                vmem_limit_bytes=int(vmem_limit),
            ),
        )(x2d, w1_p, b1_p, w2_p, b2_p)
    else:
        # Streaming fallback (large f32 weights / v7x 64 MiB VMEM).
        grid = (M_p // tm_eff, d_ff_p // tk)
        tile_bytes = (
            2 * tm_eff * d_model_p * w_bytes                    # x tile (2 bufs)
            + 2 * (d_model_p * tk + tk * d_model_p) * w_bytes   # w1/w2 tiles
            + 2 * (tk + d_model_p) * 4                          # biases
            + 2 * tm_eff * d_model_p * out_bytes                # output tile
            + tm_eff * d_model_p * 4                            # f32 accumulator
            + tm_eff * tk * (4 + w_bytes)                       # h temp + cast copy
        )
        vmem_limit = min(tile_bytes + (8 << 20), _VMEM_CAP - (2 << 20))
        out2d = pl.pallas_call(
            ffn_kernel_streamed,
            out_shape=jax.ShapeDtypeStruct((M_p, d_model_p), out_dtype),
            grid_spec=pltpu.PrefetchScalarGridSpec(
                num_scalar_prefetch=0,
                grid=grid,
                in_specs=[
                    pl.BlockSpec((tm_eff, d_model_p), lambda i, k: (i, 0)),  # x rows
                    pl.BlockSpec((d_model_p, tk), lambda i, k: (0, k)),      # w1 tile
                    pl.BlockSpec((1, tk), lambda i, k: (0, k)),              # b1 tile
                    pl.BlockSpec((tk, d_model_p), lambda i, k: (k, 0)),      # w2 tile
                    pl.BlockSpec((1, d_model_p), lambda i, k: (0, 0)),       # b2
                ],
                out_specs=pl.BlockSpec((tm_eff, d_model_p), lambda i, k: (i, 0)),
                scratch_shapes=[pltpu.VMEM((tm_eff, d_model_p), jnp.float32)],
            ),
            compiler_params=pltpu.CompilerParams(
                dimension_semantics=("parallel", "arbitrary"),
                vmem_limit_bytes=int(vmem_limit),
            ),
        )(x2d, w1_p, b1_p, w2_p, b2_p)

    if M_p != M or d_model_p != d_model:
        out2d = out2d[:M, :d_model]
    return out2d.reshape(batch, seq, d_model)


def position_wise_ffn(x, params: FFNParams, *, tm=512, force_streaming=False):
    """x: (batch, seq, d_model) -> (batch, seq, d_model), x.dtype."""
    return _ffn_impl(x, params.w1, params.b1, params.w2, params.b2,
                     tk=params.tk, tm=tm, force_streaming=force_streaming)


# ----------------------------------------------------------------------------
# nn.Linear-style init (weights pre-transposed to (in, out) layout)
# ----------------------------------------------------------------------------
def init_params(key, d_model, d_ff, dtype=jnp.float32):
    """Uniform +/- 1/sqrt(fan_in); bf16 weights recommended on v5e/v6e/v7x."""
    k1, k2, k3, k4 = jax.random.split(key, 4)
    bound1 = 1.0 / math.sqrt(d_model)
    bound2 = 1.0 / math.sqrt(d_ff)
    w1 = jax.random.uniform(k1, (d_model, d_ff), jnp.float32,
                            -bound1, bound1).astype(dtype)
    b1 = jax.random.uniform(k2, (d_ff,), jnp.float32, -bound1, bound1)
    w2 = jax.random.uniform(k3, (d_ff, d_model), jnp.float32,
                            -bound2, bound2).astype(dtype)
    b2 = jax.random.uniform(k4, (d_model,), jnp.float32, -bound2, bound2)
    return w1, b1, w2, b2


if __name__ == "__main__":
    batch, seq, d_model, d_ff = 2, 8, 32, 64

    key = jax.random.PRNGKey(0)
    kx, kp = jax.random.split(key)
    x = jax.random.normal(kx, (batch, seq, d_model), jnp.float32)

    # f32 weights: exact check against plain JAX (weights-resident path).
    w1, b1, w2, b2 = init_params(kp, d_model, d_ff, dtype=jnp.float32)
    params = prepare_params(w1, b1, w2, b2)
    ref = jnp.maximum(x @ w1 + b1, 0.0) @ w2 + b2

    out = jax.block_until_ready(position_wise_ffn(x, params))
    assert out.shape == x.shape and out.dtype == x.dtype
    assert jnp.allclose(out, ref, atol=1e-5, rtol=1e-5)

    # Same params through the streaming (d_ff-tiled) fallback path.
    out_s = jax.block_until_ready(
        position_wise_ffn(x, params, force_streaming=True))
    assert jnp.allclose(out_s, ref, atol=1e-5, rtol=1e-5)

    # bf16 weights (fast path on all generations): x is cast to bf16 for the
    # MXU, so results differ slightly from a pure-fp32 PyTorch FFN.
    w1b, b1b, w2b, b2b = init_params(kp, d_model, d_ff, dtype=jnp.bfloat16)
    params_b = prepare_params(w1b, b1b, w2b, b2b)
    out_b = jax.block_until_ready(position_wise_ffn(x, params_b))
    ref_b = (jnp.maximum(
        x.astype(jnp.bfloat16).astype(jnp.float32) @ w1b.astype(jnp.float32)
        + b1b, 0.0) @ w2b.astype(jnp.float32) + b2b)
    assert out_b.shape == x.shape
    assert jnp.allclose(out_b, ref_b, atol=5e-2, rtol=5e-2)

    print("KERNEL_OK")
</pallas_src>

<mosaic_0001>
module attributes {stable_mosaic.version = 11 : i64} {
  func.func @ffn_kernel_resident(%arg0: i32, %arg1: memref<8x128xf32, #tpu.memory_space<vmem>>, %arg2: memref<128x256xf32, #tpu.memory_space<vmem>>, %arg3: memref<1x256xf32, #tpu.memory_space<vmem>>, %arg4: memref<256x128xf32, #tpu.memory_space<vmem>>, %arg5: memref<1x128xf32, #tpu.memory_space<vmem>>, %arg6: memref<8x128xf32, #tpu.memory_space<vmem>>) attributes {dimension_semantics = [#tpu.dimension_semantics<parallel>], iteration_bounds = array<i64: 2>, scalar_prefetch = 0 : i64, scratch_operands = 0 : i64, tpu.core_type = #tpu.core_type<tc>, window_params = [{transform_indices = @transform_0, window_bounds = array<i64: 8, 128>}, {pipeline_mode = #tpu.pipeline_mode<synchronous>, transform_indices = @transform_1, window_bounds = array<i64: 128, 256>}, {pipeline_mode = #tpu.pipeline_mode<synchronous>, transform_indices = @transform_2, window_bounds = array<i64: 1, 256>}, {pipeline_mode = #tpu.pipeline_mode<synchronous>, transform_indices = @transform_3, window_bounds = array<i64: 256, 128>}, {pipeline_mode = #tpu.pipeline_mode<synchronous>, transform_indices = @transform_4, window_bounds = array<i64: 1, 128>}, {transform_indices = @transform_5, window_bounds = array<i64: 8, 128>}]} {
    %c0 = arith.constant 0 : index
    %c0_0 = arith.constant 0 : index
    %0 = vector.load %arg1[%c0, %c0_0] : memref<8x128xf32, #tpu.memory_space<vmem>>, vector<8x128xf32>
    %c0_1 = arith.constant 0 : index
    %c0_2 = arith.constant 0 : index
    %1 = vector.load %arg2[%c0_1, %c0_2] : memref<128x256xf32, #tpu.memory_space<vmem>>, vector<128x256xf32>
    %cst = arith.constant dense<0.000000e+00> : vector<8x256xf32>
    %2 = tpu.matmul %0, %1, %cst {dimension_numbers = #tpu.dot_dimension_numbers<[1], [0], [0], [1], [0, 0, 1, 1], [], []>} : vector<8x128xf32>, vector<128x256xf32>, vector<8x256xf32> -> vector<8x256xf32>
    %c0_3 = arith.constant 0 : index
    %c0_4 = arith.constant 0 : index
    %3 = vector.load %arg3[%c0_3, %c0_4] : memref<1x256xf32, #tpu.memory_space<vmem>>, vector<1x256xf32>
    %4 = vector.broadcast %3 : vector<1x256xf32> to vector<8x256xf32>
    %5 = arith.addf %2, %4 : vector<8x256xf32>
    %cst_5 = arith.constant 0.000000e+00 : f32
    %6 = vector.broadcast %cst_5 : f32 to vector<8x256xf32>
    %7 = arith.maximumf %5, %6 : vector<8x256xf32>
    %c0_6 = arith.constant 0 : index
    %c0_7 = arith.constant 0 : index
    %8 = vector.load %arg4[%c0_6, %c0_7] : memref<256x128xf32, #tpu.memory_space<vmem>>, vector<256x128xf32>
    %cst_8 = arith.constant dense<0.000000e+00> : vector<8x128xf32>
    %9 = tpu.matmul %7, %8, %cst_8 {dimension_numbers = #tpu.dot_dimension_numbers<[1], [0], [0], [1], [0, 0, 1, 1], [], []>} : vector<8x256xf32>, vector<256x128xf32>, vector<8x128xf32> -> vector<8x128xf32>
    %c0_9 = arith.constant 0 : index
    %c0_10 = arith.constant 0 : index
    %10 = vector.load %arg5[%c0_9, %c0_10] : memref<1x128xf32, #tpu.memory_space<vmem>>, vector<1x128xf32>
    %11 = vector.broadcast %10 : vector<1x128xf32> to vector<8x128xf32>
    %12 = arith.addf %9, %11 : vector<8x128xf32>
    %c0_11 = arith.constant 0 : index
    %c0_12 = arith.constant 0 : index
    %13 = vector.load %arg6[%c0_11, %c0_12] : memref<8x128xf32, #tpu.memory_space<vmem>>, vector<8x128xf32>
    tpu.vector_store %arg6[%c0_11, %c0_12], %12 {strides = array<i32>} : memref<8x128xf32, #tpu.memory_space<vmem>>, vector<8x128xf32>,
    return
  }
  func.func @transform_0(%arg0: i32) -> (i32, i32) {
    %c0_i32 = arith.constant 0 : i32
    %c0_i32_0 = arith.constant 0 : i32
    return %arg0, %c0_i32 : i32, i32
  }
  func.func @transform_1(%arg0: i32) -> (i32, i32) {
    %c0_i32 = arith.constant 0 : i32
    %c0_i32_0 = arith.constant 0 : i32
    %c0_i32_1 = arith.constant 0 : i32
    return %c0_i32, %c0_i32_0 : i32, i32
  }
  func.func @transform_2(%arg0: i32) -> (i32, i32) {
    %c0_i32 = arith.constant 0 : i32
    %c0_i32_0 = arith.constant 0 : i32
    %c0_i32_1 = arith.constant 0 : i32
    return %c0_i32, %c0_i32_0 : i32, i32
  }
  func.func @transform_3(%arg0: i32) -> (i32, i32) {
    %c0_i32 = arith.constant 0 : i32
    %c0_i32_0 = arith.constant 0 : i32
    %c0_i32_1 = arith.constant 0 : i32
    return %c0_i32, %c0_i32_0 : i32, i32
  }
  func.func @transform_4(%arg0: i32) -> (i32, i32) {
    %c0_i32 = arith.constant 0 : i32
    %c0_i32_0 = arith.constant 0 : i32
    %c0_i32_1 = arith.constant 0 : i32
    return %c0_i32, %c0_i32_0 : i32, i32
  }
  func.func @transform_5(%arg0: i32) -> (i32, i32) {
    %c0_i32 = arith.constant 0 : i32
    %c0_i32_0 = arith.constant 0 : i32
    return %arg0, %c0_i32 : i32, i32
  }
}

</mosaic_0001>

<llo_original>
// kernel: _ffn_impl.1
$region0: #{_ffn_impl.1}
  #allocation0 [shape = 'u32[]', space=smem, size = 0x4, offset = 0x4, fixed_abs, tag = 'smem constant byte address 0x4 - core index']
  #allocation1 [shape = 'u32[144,128]{1,0:T(1,128)}', space=vmem, size = 0x12000, scoped, tag = 'internal scratch']
  %s0 = inlined_call_operand.vmem [shape: f32[16,128], index: 0, kind: input, shape index: {}]
  %s1 = inlined_call_operand.hbm [shape: f32[128,256], index: 1, kind: input, shape index: {}]
  %s2 = inlined_call_operand.vmem [shape: f32[1,256], index: 2, kind: input, shape index: {}]
  %s3 = inlined_call_operand.hbm [shape: f32[256,128], index: 3, kind: input, shape index: {}]
  %s4 = inlined_call_operand.vmem [shape: f32[1,128], index: 4, kind: input, shape index: {}]
  %s5 = inlined_call_operand.vmem [shape: f32[16,128], index: 5, kind: output, shape index: {}]
  %s6 = sld [smem:[#allocation0]]
  $region61: #{_ffn_impl.1} parent=0
    _
  %s8 = ssub.s32 1, %s6
  %s9 = scalar_select 0, %s8, %s6
  $region1: #{_ffn_impl.1} parent=0
    #allocation2 [shape = 'u8[131072]{0}', space=vmem, size = 0x20000, scoped, tag = 'input window, operand 1, single buffered']
    #allocation3 [shape = 's32[2]{0}', space=sflag, size = 0x8, scoped, tag = 'scoped memory for _ffn_impl.1']
    #allocation4 [shape = 'u8[131072]{0}', space=vmem, size = 0x20000, scoped, tag = 'input window, operand 3, single buffered']
    #allocation5 [shape = 's32[1]{0}', space=sflag, size = 0x4, scoped, tag = 'scoped memory for _ffn_impl.1']
    %10 = vsyncpa [#allocation3], 0
    %11 = vsyncpa [#allocation5], 0
    loop: start=0, step=1, limit=4
    $region2: #{_ffn_impl.1} parent=1 // loop_pre_header
      _
    $region3: #{_ffn_impl.1} parent=1 // loop_header
      %s13 = sphi 0, %s17
      %p14 = scmp.ge.s32.totalorder %s13, 4
      %s23 = sphi 0, %s25
      %s26 = sphi 0, %s23
      %s27 = sphi 0, %s26
      %s43 = sphi 0, %s27
      %s47 = sphi 0, %s47
      %s49 = sphi 0, %s47
      %s50 = sphi 0, %s49
      %s64 = sphi 0, %s50
      %s68 = sphi 0, %s68
      %s70 = sphi 0, %s68
      %s71 = sphi 0, %s70
      %s85 = sphi 0, %s71
      %s89 = sphi 0, %s89
      %s91 = sphi 0, %s89
      %s92 = sphi 0, %s91
      %s106 = sphi 0, %s92
      %s110 = sphi 0, %s110
      %s112 = sphi 0, %s110
      %s113 = sphi 0, %s112
      %s127 = sphi 0, %s113
      %s133 = sphi 0, %s135
      %s136 = sphi 0, %s133
      %s137 = sphi 0, %s136
      %s153 = sphi 0, %s137
    $region4: #{_ffn_impl.1} parent=1 // loop_header_branch
      %16 = sbr.rel (%p14) target = $region8
    $region5: #{_ffn_impl.1} parent=1 // loop_body
      %s18 = ssub.s32 %s13, 1
      %s19 = ssub.s32 %s13, 2
      %s20 = sadd.s32 %s13, 1
      %s21 = ssub.s32 %s13, %s20
      %p22 = scmp.eq.s32.totalorder %s21, 0
      %s24 = sadd.s32 %s23, 1
      %s25 = scalar_select %p22, %s23, %s24
      %p28 = pneg %p22
      %p29 = scmp.eq.s32.totalorder %s13, 1
      %p30 = por %p28, %p29
      %p31 = scmp.ne.s32.totalorder %s23, %s26
      %p32 = scmp.eq.s32.totalorder %s13, 0
      %p33 = por %p31, %p32
      %p34 = scmp.ne.s32.totalorder %s23, %s26
      %p35 = scmp.eq.s32.totalorder %s18, 1
      %p36 = por %p34, %p35
      %p37 = scmp.ne.s32.totalorder %s26, %s27
      %p38 = scmp.eq.s32.totalorder %s18, 0
      %p39 = por %p37, %p38
      %p40 = scmp.ne.s32.totalorder %s26, %s27
      %p41 = scmp.eq.s32.totalorder %s19, 1
      %p42 = por %p40, %p41
      %p44 = scmp.ne.s32.totalorder %s27, %s43
      %p45 = scmp.eq.s32.totalorder %s19, 0
      %p46 = por %p44, %p45
      %s48 = sadd.s32 %s47, 1
      %p51 = scmp.eq.s32.totalorder %s13, 1
      %p52 = scmp.ne.s32.totalorder %s47, %s49
      %p53 = scmp.eq.s32.totalorder %s13, 0
      %p54 = por %p52, %p53
      %p55 = scmp.ne.s32.totalorder %s47, %s49
      %p56 = scmp.eq.s32.totalorder %s18, 1
      %p57 = por %p55, %p56
      %p58 = scmp.ne.s32.totalorder %s49, %s50
      %p59 = scmp.eq.s32.totalorder %s18, 0
      %p60 = por %p58, %p59
      %p61 = scmp.ne.s32.totalorder %s49, %s50
      %p62 = scmp.eq.s32.totalorder %s19, 1
      %p63 = por %p61, %p62
      %p65 = scmp.ne.s32.totalorder %s50, %s64
      %p66 = scmp.eq.s32.totalorder %s19, 0
      %p67 = por %p65, %p66
      %s69 = sadd.s32 %s68, 1
      %p72 = scmp.eq.s32.totalorder %s13, 1
      %p73 = scmp.ne.s32.totalorder %s68, %s70
      %p74 = scmp.eq.s32.totalorder %s13, 0
      %p75 = por %p73, %p74
      %p76 = scmp.ne.s32.totalorder %s68, %s70
      %p77 = scmp.eq.s32.totalorder %s18, 1
      %p78 = por %p76, %p77
      %p79 = scmp.ne.s32.totalorder %s70, %s71
      %p80 = scmp.eq.s32.totalorder %s18, 0
      %p81 = por %p79, %p80
      %p82 = scmp.ne.s32.totalorder %s70, %s71
      %p83 = scmp.eq.s32.totalorder %s19, 1
      %p84 = por %p82, %p83
      %p86 = scmp.ne.s32.totalorder %s71, %s85
      %p87 = scmp.eq.s32.totalorder %s19, 0
      %p88 = por %p86, %p87
      %s90 = sadd.s32 %s89, 1
      %p93 = scmp.eq.s32.totalorder %s13, 1
      %p94 = scmp.ne.s32.totalorder %s89, %s91
      %p95 = scmp.eq.s32.totalorder %s13, 0
      %p96 = por %p94, %p95
      %p97 = scmp.ne.s32.totalorder %s89, %s91
      %p98 = scmp.eq.s32.totalorder %s18, 1
      %p99 = por %p97, %p98
      %p100 = scmp.ne.s32.totalorder %s91, %s92
      %p101 = scmp.eq.s32.totalorder %s18, 0
      %p102 = por %p100, %p101
      %p103 = scmp.ne.s32.totalorder %s91, %s92
      %p104 = scmp.eq.s32.totalorder %s19, 1
      %p105 = por %p103, %p104
      %p107 = scmp.ne.s32.totalorder %s92, %s106
      %p108 = scmp.eq.s32.totalorder %s19, 0
      %p109 = por %p107, %p108
      %s111 = sadd.s32 %s110, 1
      %p114 = scmp.eq.s32.totalorder %s13, 1
      %p115 = scmp.ne.s32.totalorder %s110, %s112
      %p116 = scmp.eq.s32.totalorder %s13, 0
      %p117 = por %p115, %p116
      %p118 = scmp.ne.s32.totalorder %s110, %s112
      %p119 = scmp.eq.s32.totalorder %s18, 1
      %p120 = por %p118, %p119
      %p121 = scmp.ne.s32.totalorder %s112, %s113
      %p122 = scmp.eq.s32.totalorder %s18, 0
      %p123 = por %p121, %p122
      %p124 = scmp.ne.s32.totalorder %s112, %s113
      %p125 = scmp.eq.s32.totalorder %s19, 1
      %p126 = por %p124, %p125
      %p128 = scmp.ne.s32.totalorder %s113, %s127
      %p129 = scmp.eq.s32.totalorder %s19, 0
      %p130 = por %p128, %p129
      %s131 = ssub.s32 %s13, %s20
      %p132 = scmp.eq.s32.totalorder %s131, 0
      %s134 = sadd.s32 %s133, 1
      %s135 = scalar_select %p132, %s133, %s134
      %p138 = pneg %p132
      %p139 = scmp.eq.s32.totalorder %s13, 1
      %p140 = por %p138, %p139
      %p141 = scmp.ne.s32.totalorder %s133, %s136
      %p142 = scmp.eq.s32.totalorder %s13, 0
      %p143 = por %p141, %p142
      %p144 = scmp.ne.s32.totalorder %s133, %s136
      %p145 = scmp.eq.s32.totalorder %s18, 1
      %p146 = por %p144, %p145
      %p147 = scmp.ne.s32.totalorder %s136, %s137
      %p148 = scmp.eq.s32.totalorder %s18, 0
      %p149 = por %p147, %p148
      %p150 = scmp.ne.s32.totalorder %s136, %s137
      %p151 = scmp.eq.s32.totalorder %s19, 1
      %p152 = por %p150, %p151
      %p154 = scmp.ne.s32.totalorder %s137, %s153
      %p155 = scmp.eq.s32.totalorder %s19, 0
      %p156 = por %p154, %p155
      %p157 = scmp.le.s32.totalorder 1, %s13
      %p158 = scmp.lt.s32.totalorder %s13, 3
      %p159 = pnand %p157, %p158
      %p160 = pneg %p159
      // Predicated region
      $region9: #{_ffn_impl.1} parent=5 // pred_check
        _
      $region10: #{_ffn_impl.1} parent=5 // pred_check_branch
        %162 = sbr.rel (%p159) target = $region12
      $region11: #{_ffn_impl.1} parent=5 // pred_region
        %s163 = ssub.s32 %s13, 1
        // Predicated region
        $region13: #{_ffn_impl.1} parent=11 // pred_check
          %p164 = pneg %p60
        $region14: #{_ffn_impl.1} parent=11 // pred_check_branch
          %166 = sbr.rel (%p164) target = $region16
        $region15: #{_ffn_impl.1} parent=11 // pred_region
          %s168 = ssub.s32 4096, 4096
          %169 = vsyncadd [#allocation3], %s168
          %s170 = sshll.u32 [#allocation2], 4
          %s171 = int_to_ptr.vmem [resolvable:$true] %s170
          %176 = dma.hbm_to_vmem [thread:$0]  %s1, 4096, %s171, [#allocation3], 256, 256, 16
        $region16: #{_ffn_impl.1} parent=11 // pred_fallthru
          _
        // Predicated region
        $region17: #{_ffn_impl.1} parent=11 // pred_check
          %p177 = pneg %p81
        $region18: #{_ffn_impl.1} parent=11 // pred_check_branch
          %179 = sbr.rel (%p177) target = $region20
        $region19: #{_ffn_impl.1} parent=11 // pred_region
          _
        $region20: #{_ffn_impl.1} parent=11 // pred_fallthru
          _
        // Predicated region
        $region21: #{_ffn_impl.1} parent=11 // pred_check
          %p180 = pneg %p102
        $region22: #{_ffn_impl.1} parent=11 // pred_check_branch
          %182 = sbr.rel (%p180) target = $region24
        $region23: #{_ffn_impl.1} parent=11 // pred_region
          %s184 = ssub.s32 4096, 4096
          %185 = vsyncadd [#allocation5], %s184
          %s186 = sshll.u32 [#allocation4], 4
          %s187 = int_to_ptr.vmem [resolvable:$true] %s186
          %192 = dma.hbm_to_vmem [thread:$0]  %s3, 4096, %s187, [#allocation5], 128, 128, 8
        $region24: #{_ffn_impl.1} parent=11 // pred_fallthru
          _
        // Predicated region
        $region25: #{_ffn_impl.1} parent=11 // pred_check
          %p193 = pneg %p123
        $region26: #{_ffn_impl.1} parent=11 // pred_check_branch
          %195 = sbr.rel (%p193) target = $region28
        $region27: #{_ffn_impl.1} parent=11 // pred_region
          _
        $region28: #{_ffn_impl.1} parent=11 // pred_fallthru
          _
      $region12: #{_ffn_impl.1} parent=5 // pred_fallthru
        _
      %p196 = scmp.lt.s32.totalorder %s13, 2
      // Predicated region
      $region29: #{_ffn_impl.1} parent=5 // pred_check
        %p197 = pneg %p196
      $region30: #{_ffn_impl.1} parent=5 // pred_check_branch
        %199 = sbr.rel (%p197) target = $region32
      $region31: #{_ffn_impl.1} parent=5 // pred_region
        // Predicated region
        $region33: #{_ffn_impl.1} parent=31 // pred_check
          %p200 = pneg %p33
        $region34: #{_ffn_impl.1} parent=31 // pred_check_branch
          %202 = sbr.rel (%p200) target = $region36
        $region35: #{_ffn_impl.1} parent=31 // pred_region
          %p203 = scmp.lt.s32.totalorder %s13, 1
          %s204 = scalar_select %p203, %s13, 1
          %s205 = smul.addr %s204, 8
          %s206 = scalar_lea.vmem %s0, %s205
        $region36: #{_ffn_impl.1} parent=31 // pred_fallthru
          _
      $region32: #{_ffn_impl.1} parent=5 // pred_fallthru
        _
      %p207 = scmp.le.s32.totalorder 1, %s13
      %p208 = scmp.lt.s32.totalorder %s13, 3
      %p209 = pnand %p207, %p208
      %p210 = pneg %p209
      // Predicated region
      $region37: #{_ffn_impl.1} parent=5 // pred_check
        _
      $region38: #{_ffn_impl.1} parent=5 // pred_check_branch
        %212 = sbr.rel (%p209) target = $region40
      $region39: #{_ffn_impl.1} parent=5 // pred_region
        %s213 = ssub.s32 %s13, 1
        // Predicated region
        $region41: #{_ffn_impl.1} parent=39 // pred_check
          %p214 = pneg %p60
        $region42: #{_ffn_impl.1} parent=39 // pred_check_branch
          %216 = sbr.rel (%p214) target = $region44
        $region43: #{_ffn_impl.1} parent=39 // pred_region
          %217 = dma.done [#allocation3], 4096
        $region44: #{_ffn_impl.1} parent=39 // pred_fallthru
          _
        // Predicated region
        $region45: #{_ffn_impl.1} parent=39 // pred_check
          %p218 = pneg %p102
        $region46: #{_ffn_impl.1} parent=39 // pred_check_branch
          %220 = sbr.rel (%p218) target = $region48
        $region47: #{_ffn_impl.1} parent=39 // pred_region
          %221 = dma.done [#allocation5], 4096
        $region48: #{_ffn_impl.1} parent=39 // pred_fallthru
          _
        %p222 = scmp.lt.s32.totalorder %s18, 1
        %s223 = scalar_select %p222, %s18, 1
        %s224 = smul.addr %s223, 8
        %s225 = scalar_lea.vmem %s0, %s224
        %p226 = pneg %p39
        %p227 = pneg %p36
        %p228 = pneg %p60
        %p229 = pneg %p57
        %p230 = pneg %p81
        %p231 = pneg %p78
        %p232 = pneg %p102
        %p233 = pneg %p99
        %p234 = pneg %p123
        %p235 = pneg %p120
        %p236 = pneg %p149
        %p237 = pneg %p146
        %p238 = scmp.lt.s32.totalorder %s18, 1
        %s239 = scalar_select %p238, %s18, 1
        %s240 = smul.addr %s239, 8
        %s241 = scalar_lea.vmem %s5, %s240
        %p242 = scmp.lt.s32.totalorder %s18, 1
        %s243 = scalar_select %p242, %s18, 1
        %s244 = smul.addr %s243, 8
        %s245 = scalar_lea.vmem %s0, %s244
        %p246 = scmp.lt.s32.totalorder %s18, 1
        %s247 = scalar_select %p246, %s18, 1
        %s248 = smul.addr %s247, 8
        %s249 = scalar_lea.vmem %s5, %s248
        %v250 = vld [vmem:[%s245] sm:$0xff]
        %v251 = vld [vmem:[#allocation2] sm:$0xff]
        %v252 = vld [vmem:[#allocation2 + $0x8] sm:$0xff]
        %v253 = vld [vmem:[#allocation2 + $0x10] sm:$0xff]
        %v254 = vld [vmem:[#allocation2 + $0x18] sm:$0xff]
        %v255 = vld [vmem:[#allocation2 + $0x20] sm:$0xff]
        %v256 = vld [vmem:[#allocation2 + $0x28] sm:$0xff]
        %v257 = vld [vmem:[#allocation2 + $0x30] sm:$0xff]
        %v258 = vld [vmem:[#allocation2 + $0x38] sm:$0xff]
        %v259 = vld [vmem:[#allocation2 + $0x40] sm:$0xff]
        %v260 = vld [vmem:[#allocation2 + $0x48] sm:$0xff]
        %v261 = vld [vmem:[#allocation2 + $0x50] sm:$0xff]
        %v262 = vld [vmem:[#allocation2 + $0x58] sm:$0xff]
        %v263 = vld [vmem:[#allocation2 + $0x60] sm:$0xff]
        %v264 = vld [vmem:[#allocation2 + $0x68] sm:$0xff]
        %v265 = vld [vmem:[#allocation2 + $0x70] sm:$0xff]
        %v266 = vld [vmem:[#allocation2 + $0x78] sm:$0xff]
        %v267 = vld [vmem:[#allocation2 + $0x80] sm:$0xff]
        %v268 = vld [vmem:[#allocation2 + $0x88] sm:$0xff]
        %v269 = vld [vmem:[#allocation2 + $0x90] sm:$0xff]
        %v270 = vld [vmem:[#allocation2 + $0x98] sm:$0xff]
        %v271 = vld [vmem:[#allocation2 + $0xa0] sm:$0xff]
        %v272 = vld [vmem:[#allocation2 + $0xa8] sm:$0xff]
        %v273 = vld [vmem:[#allocation2 + $0xb0] sm:$0xff]
        %v274 = vld [vmem:[#allocation2 + $0xb8] sm:$0xff]
        %v275 = vld [vmem:[#allocation2 + $0xc0] sm:$0xff]
        %v276 = vld [vmem:[#allocation2 + $0xc8] sm:$0xff]
        %v277 = vld [vmem:[#allocation2 + $0xd0] sm:$0xff]
        %v278 = vld [vmem:[#allocation2 + $0xd8] sm:$0xff]
        %v279 = vld [vmem:[#allocation2 + $0xe0] sm:$0xff]
        %v280 = vld [vmem:[#allocation2 + $0xe8] sm:$0xff]
        %v281 = vld [vmem:[#allocation2 + $0xf0] sm:$0xff]
        %v282 = vld [vmem:[#allocation2 + $0xf8] sm:$0xff]
        %v283 = vld [vmem:[%s2] sm:$0x3]
        %v285 = vlaneseq
        %v286 = vshrl.u32 %v285, 7
        %v287 = vsub.s32 0, %v286
        %v288 = vrot.slane %v283, %v287
        %v289 = vlaneseq
        %v290 = vshrl.u32 %v289, 7
        %v291 = vsub.s32 1, %v290
        %v292 = vrot.slane %v283, %v291
        %295 = vmatprep.subr.mxu0 %v252
        %296 = vmatpush1.msra.mxu0 %v251
        %297 = vmatprep.subr.mxu0 %v254
        %298 = vmatpush1.msra.mxu0 %v253
        %299 = vmatprep.subr.mxu0 %v256
        %300 = vmatpush1.msra.mxu0 %v255
        %301 = vmatprep.subr.mxu0 %v258
        %302 = vmatpush1.msra.mxu0 %v257
        %303 = vmatprep.subr.mxu0 %v260
        %304 = vmatpush1.msra.mxu0 %v259
        %305 = vmatprep.subr.mxu0 %v262
        %306 = vmatpush1.msra.mxu0 %v261
        %307 = vmatprep.subr.mxu0 %v264
        %308 = vmatpush1.msra.mxu0 %v263
        %309 = vmatprep.subr.mxu0 %v266
        %310 = vmatpush1.msra.mxu0 %v265
        %311 = vmatprep.subr.mxu0 %v268
        %312 = vmatpush1.msra.mxu0 %v267
        %313 = vmatprep.subr.mxu0 %v270
        %314 = vmatpush1.msra.mxu0 %v269
        %315 = vmatprep.subr.mxu0 %v272
        %316 = vmatpush1.msra.mxu0 %v271
        %317 = vmatprep.subr.mxu0 %v274
        %318 = vmatpush1.msra.mxu0 %v273
        %319 = vmatprep.subr.mxu0 %v276
        %320 = vmatpush1.msra.mxu0 %v275
        %321 = vmatprep.subr.mxu0 %v278
        %322 = vmatpush1.msra.mxu0 %v277
        %323 = vmatprep.subr.mxu0 %v280
        %324 = vmatpush1.msra.mxu0 %v279
        %325 = vmatprep.subr.mxu0 %v282
        %326 = vmatpush1.msra.mxu0 %v281
        %327 = vmatprep.subr.mxu0 0.0
        %328 = vmatpush1.msra.mxu0 0.0
        %329 = vmatprep.subr.mxu0 0.0
        %330 = vmatpush1.msra.mxu0 0.0
        %331 = vmatprep.subr.mxu0 0.0
        %332 = vmatpush1.msra.mxu0 0.0
        %333 = vmatprep.subr.mxu0 0.0
        %334 = vmatpush1.msra.mxu0 0.0
        %335 = vmatprep.subr.mxu0 0.0
        %336 = vmatpush1.msra.mxu0 0.0
        %337 = vmatprep.subr.mxu0 0.0
        %338 = vmatpush1.msra.mxu0 0.0
        %339 = vmatprep.subr.mxu0 0.0
        %340 = vmatpush1.msra.mxu0 0.0
        %341 = vmatprep.subr.mxu0 0.0
        %342 = vmatpush1.msra.mxu0 0.0
        %343 = vmatprep.subr.mxu0 0.0
        %344 = vmatpush1.msra.mxu0 0.0
        %345 = vmatprep.subr.mxu0 0.0
        %346 = vmatpush1.msra.mxu0 0.0
        %347 = vmatprep.subr.mxu0 0.0
        %348 = vmatpush1.msra.mxu0 0.0
        %349 = vmatprep.subr.mxu0 0.0
        %350 = vmatpush1.msra.mxu0 0.0
        %351 = vmatprep.subr.mxu0 0.0
        %352 = vmatpush1.msra.mxu0 0.0
        %353 = vmatprep.subr.mxu0 0.0
        %354 = vmatpush1.msra.mxu0 0.0
        %355 = vmatprep.subr.mxu0 0.0
        %356 = vmatpush1.msra.mxu0 0.0
        %357 = vmatprep.subr.mxu0 0.0
        %358 = vmatpush1.msra.mxu0 0.0
        %359 = vmatprep.mubr.f32.mxu0 0.0
        %360 = vmatmul.mubr.f32.gmra.mrb[0].mxu0 %v250
        %v361 = vpop.f32.mrb[0].mxu0
        %v362 = vadd.f32 %v288, %v361
        %v363 = vpop.f32.mrb[0].mxu0
        %v364 = vadd.f32 %v292, %v363
        %365 = vdwg.mxu0
        %v366 = vmax.f32 %v362, 0.0
        %v367 = vmax.f32 %v364, 0.0
        %v368 = vld [vmem:[#allocation4] sm:$0xff]
        %v369 = vld [vmem:[#allocation4 + $0x8] sm:$0xff]
        %v370 = vld [vmem:[#allocation4 + $0x10] sm:$0xff]
        %v371 = vld [vmem:[#allocation4 + $0x18] sm:$0xff]
        %v372 = vld [vmem:[#allocation4 + $0x20] sm:$0xff]
        %v373 = vld [vmem:[#allocation4 + $0x28] sm:$0xff]
        %v374 = vld [vmem:[#allocation4 + $0x30] sm:$0xff]
        %v375 = vld [vmem:[#allocation4 + $0x38] sm:$0xff]
        %v376 = vld [vmem:[#allocation4 + $0x40] sm:$0xff]
        %v377 = vld [vmem:[#allocation4 + $0x48] sm:$0xff]
        %v378 = vld [vmem:[#allocation4 + $0x50] sm:$0xff]
        %v379 = vld [vmem:[#allocation4 + $0x58] sm:$0xff]
        %v380 = vld [vmem:[#allocation4 + $0x60] sm:$0xff]
        %v381 = vld [vmem:[#allocation4 + $0x68] sm:$0xff]
        %v382 = vld [vmem:[#allocation4 + $0x70] sm:$0xff]
        %v383 = vld [vmem:[#allocation4 + $0x78] sm:$0xff]
        %v384 = vld [vmem:[#allocation4 + $0x80] sm:$0xff]
        %v385 = vld [vmem:[#allocation4 + $0x88] sm:$0xff]
        %v386 = vld [vmem:[#allocation4 + $0x90] sm:$0xff]
        %v387 = vld [vmem:[#allocation4 + $0x98] sm:$0xff]
        %v388 = vld [vmem:[#allocation4 + $0xa0] sm:$0xff]
        %v389 = vld [vmem:[#allocation4 + $0xa8] sm:$0xff]
        %v390 = vld [vmem:[#allocation4 + $0xb0] sm:$0xff]
        %v391 = vld [vmem:[#allocation4 + $0xb8] sm:$0xff]
        %v392 = vld [vmem:[#allocation4 + $0xc0] sm:$0xff]
        %v393 = vld [vmem:[#allocation4 + $0xc8] sm:$0xff]
        %v394 = vld [vmem:[#allocation4 + $0xd0] sm:$0xff]
        %v395 = vld [vmem:[#allocation4 + $0xd8] sm:$0xff]
        %v396 = vld [vmem:[#allocation4 + $0xe0] sm:$0xff]
        %v397 = vld [vmem:[#allocation4 + $0xe8] sm:$0xff]
        %v398 = vld [vmem:[#allocation4 + $0xf0] sm:$0xff]
        %v399 = vld [vmem:[#allocation4 + $0xf8] sm:$0xff]
        %v400 = vld [vmem:[%s4] sm:$0x1]
        %v402 = vlaneseq
        %v403 = vshrl.u32 %v402, 7
        %v404 = vsub.s32 0, %v403
        %v405 = vrot.slane %v400, %v404
        %407 = vmatprep.subr.mxu0 0.0
        %408 = vmatpush1.msra.mxu0 %v368
        %409 = vmatprep.subr.mxu0 0.0
        %410 = vmatpush1.msra.mxu0 %v369
        %411 = vmatprep.subr.mxu0 0.0
        %412 = vmatpush1.msra.mxu0 %v370
        %413 = vmatprep.subr.mxu0 0.0
        %414 = vmatpush1.msra.mxu0 %v371
        %415 = vmatprep.subr.mxu0 0.0
        %416 = vmatpush1.msra.mxu0 %v372
        %417 = vmatprep.subr.mxu0 0.0
        %418 = vmatpush1.msra.mxu0 %v373
        %419 = vmatprep.subr.mxu0 0.0
        %420 = vmatpush1.msra.mxu0 %v374
        %421 = vmatprep.subr.mxu0 0.0
        %422 = vmatpush1.msra.mxu0 %v375
        %423 = vmatprep.subr.mxu0 0.0
        %424 = vmatpush1.msra.mxu0 %v376
        %425 = vmatprep.subr.mxu0 0.0
        %426 = vmatpush1.msra.mxu0 %v377
        %427 = vmatprep.subr.mxu0 0.0
        %428 = vmatpush1.msra.mxu0 %v378
        %429 = vmatprep.subr.mxu0 0.0
        %430 = vmatpush1.msra.mxu0 %v379
        %431 = vmatprep.subr.mxu0 0.0
        %432 = vmatpush1.msra.mxu0 %v380
        %433 = vmatprep.subr.mxu0 0.0
        %434 = vmatpush1.msra.mxu0 %v381
        %435 = vmatprep.subr.mxu0 0.0
        %436 = vmatpush1.msra.mxu0 %v382
        %437 = vmatprep.subr.mxu0 0.0
        %438 = vmatpush1.msra.mxu0 %v383
        %439 = vmatprep.subr.mxu0 0.0
        %440 = vmatpush1.msra.mxu0 %v384
        %441 = vmatprep.subr.mxu0 0.0
        %442 = vmatpush1.msra.mxu0 %v385
        %443 = vmatprep.subr.mxu0 0.0
        %444 = vmatpush1.msra.mxu0 %v386
        %445 = vmatprep.subr.mxu0 0.0
        %446 = vmatpush1.msra.mxu0 %v387
        %447 = vmatprep.subr.mxu0 0.0
        %448 = vmatpush1.msra.mxu0 %v388
        %449 = vmatprep.subr.mxu0 0.0
        %450 = vmatpush1.msra.mxu0 %v389
        %451 = vmatprep.subr.mxu0 0.0
        %452 = vmatpush1.msra.mxu0 %v390
        %453 = vmatprep.subr.mxu0 0.0
        %454 = vmatpush1.msra.mxu0 %v391
        %455 = vmatprep.subr.mxu0 0.0
        %456 = vmatpush1.msra.mxu0 %v392
        %457 = vmatprep.subr.mxu0 0.0
        %458 = vmatpush1.msra.mxu0 %v393
        %459 = vmatprep.subr.mxu0 0.0
        %460 = vmatpush1.msra.mxu0 %v394
        %461 = vmatprep.subr.mxu0 0.0
        %462 = vmatpush1.msra.mxu0 %v395
        %463 = vmatprep.subr.mxu0 0.0
        %464 = vmatpush1.msra.mxu0 %v396
        %465 = vmatprep.subr.mxu0 0.0
        %466 = vmatpush1.msra.mxu0 %v397
        %467 = vmatprep.subr.mxu0 0.0
        %468 = vmatpush1.msra.mxu0 %v398
        %469 = vmatprep.subr.mxu0 0.0
        %470 = vmatpush1.msra.mxu0 %v399
        %471 = vmatprep.mubr.f32.mxu0 %v367
        %472 = vmatmul.mubr.f32.gmra.mrb[0].mxu0 %v366
        %v473 = vpop.f32.mrb[0].mxu0
        %v474 = vadd.f32 %v405, %v473
        %v475 = vpop.f32.mrb[0].mxu0
        %476 = vdwg.mxu0
        %477 = vst [vmem:[%s249] sm:$0xff] %v474
        %p478 = scmp.lt.s32.totalorder %s18, 1
        %s479 = scalar_select %p478, %s18, 1
        %s480 = smul.addr %s479, 8
        %s481 = scalar_lea.vmem %s5, %s480
        // Predicated region
        $region49: #{_ffn_impl.1} parent=39 // pred_check
          %p482 = pneg %p146
        $region50: #{_ffn_impl.1} parent=39 // pred_check_branch
          %484 = sbr.rel (%p482) target = $region52
        $region51: #{_ffn_impl.1} parent=39 // pred_region
          _
        $region52: #{_ffn_impl.1} parent=39 // pred_fallthru
          _
      $region40: #{_ffn_impl.1} parent=5 // pred_fallthru
        _
      %p485 = scmp.le.s32.totalorder 2, %s13
      // Predicated region
      $region53: #{_ffn_impl.1} parent=5 // pred_check
        %p486 = pneg %p485
      $region54: #{_ffn_impl.1} parent=5 // pred_check_branch
        %488 = sbr.rel (%p486) target = $region56
      $region55: #{_ffn_impl.1} parent=5 // pred_region
        %s489 = ssub.s32 %s13, 2
        // Predicated region
        $region57: #{_ffn_impl.1} parent=55 // pred_check
          %p490 = pneg %p152
        $region58: #{_ffn_impl.1} parent=55 // pred_check_branch
          %492 = sbr.rel (%p490) target = $region60
        $region59: #{_ffn_impl.1} parent=55 // pred_region
          %p493 = scmp.lt.s32.totalorder %s19, 1
          %s494 = scalar_select %p493, %s19, 1
          %s495 = smul.addr %s494, 8
          %s496 = scalar_lea.vmem %s5, %s495
        $region60: #{_ffn_impl.1} parent=55 // pred_fallthru
          _
      $region56: #{_ffn_impl.1} parent=5 // pred_fallthru
        _
    $region6: #{_ffn_impl.1} parent=1 // loop_footer
      %s17 = sadd.s32 1, %s13
    $region7: #{_ffn_impl.1} parent=1 // loop_footer_branch
      %12 = sbr.rel target = $region3
    $region8: #{_ffn_impl.1} parent=1 // loop_exit
      _
    %497 = vsyncpa [#allocation3], 1
    %s498 = scalar_lea.sflag [#allocation3], 1
    %499 = vsyncpa %s498, 1
    %500 = vsyncpa [#allocation5], 1

</llo_original>
